<compile_context>
chip_gen: v7x
topology: tpu7x:2x2x1
jax: 0.10.0
libtpu: 0.0.40
codegen_flags: <defaults>
</compile_context>

<pallas_src>
import jax
import jax.numpy as jnp
from jax.experimental import pallas as pl
from jax.experimental.pallas import tpu as pltpu

MIDI_WIDTH = 128
MIDI_OUT_WIDTH = 128
HIDDEN_DIM = 64
LATENT_DIM = 32
BN_EPS = 1e-5
LEAKY_SLOPE = 0.01

# Row layout of the packed (8 + B, 128) small-parameter array.
ROW_BABS = 0    # absolute_input bias        (128 lanes)
ROW_G1 = 1      # input_norm gamma           (128 lanes)
ROW_BE1 = 2     # input_norm beta            (128 lanes)
ROW_BENC = 3    # encoder Linear bias        (64 lanes, rest padded 0)
ROW_G2 = 4      # encoder BN gamma           (64 lanes)
ROW_BE2 = 5     # encoder BN beta            (64 lanes)
ROW_BHEAD = 6   # [fc_mu bias | fc_var bias] (64 lanes)
NUM_PARAM_ROWS = 8   # row 7 is zero padding; rows 8..8+B-1 hold the noise.


def _bn_train(h, gamma, beta, inv_b):
    """PyTorch BatchNorm1d, training mode: batch mean, biased variance.

    Two-pass statistics (numerically safe vs E[x^2]-E[x]^2 cancellation) with
    the affine folded into a single row-level scale so the per-element tail
    after centering is just a multiply-add.
    """
    mean = jnp.sum(h, axis=0, keepdims=True) * inv_b
    c = h - mean
    var = jnp.sum(c * c, axis=0, keepdims=True) * inv_b
    scale = gamma * jax.lax.rsqrt(var + BN_EPS)     # (1, N) row-level work
    return c * scale + beta


def encoder_kernel(
    x_ref,       # (B, 128)       first 128 lanes of the flattened input
    wabs_ref,    # (128, 128)     absolute_input weight (transposed)
    wmid_ref,    # (192, 64)      [encoder Linear ; fused mu|var head] weights
    pack_ref,    # (8 + B, 128)   packed biases / BN params / noise (ROW_*)
    out_ref,     # (B, 128)       lane-dense output slab [z | kl | mu | sigma]
):
    x = x_ref[...]
    B = x.shape[0]
    P = pack_ref[...]

    babs = P[ROW_BABS:ROW_BABS + 1, :]
    g1 = P[ROW_G1:ROW_G1 + 1, :]
    be1 = P[ROW_BE1:ROW_BE1 + 1, :]
    benc = P[ROW_BENC:ROW_BENC + 1, 0:HIDDEN_DIM]
    g2 = P[ROW_G2:ROW_G2 + 1, 0:HIDDEN_DIM]
    be2 = P[ROW_BE2:ROW_BE2 + 1, 0:HIDDEN_DIM]
    bhead = P[ROW_BHEAD:ROW_BHEAD + 1, 0:2 * LATENT_DIM]
    noise = P[NUM_PARAM_ROWS:NUM_PARAM_ROWS + B, 0:LATENT_DIM]

    # Static-offset splits of the merged weight operand (no runtime cost).
    wenc = wmid_ref[0:MIDI_OUT_WIDTH, :]                      # (128, 64)
    whead = wmid_ref[MIDI_OUT_WIDTH:MIDI_OUT_WIDTH + HIDDEN_DIM, :]  # (64, 64)

    inv_b = 1.0 / B  # static batch size

    # absolute_input Linear -> input_norm BN -> leaky_relu(0.01)
    h = jnp.dot(x, wabs_ref[...], preferred_element_type=jnp.float32) + babs
    h = _bn_train(h, g1, be1, inv_b)
    h = jnp.where(h > 0, h, LEAKY_SLOPE * h)

    # encoder: Linear(128,64) -> BN(64) -> tanh
    h = jnp.dot(h, wenc, preferred_element_type=jnp.float32) + benc
    h = _bn_train(h, g2, be2, inv_b)
    h = jnp.tanh(h)

    # fused heads: one (B,64) matmul -> lanes [mu | logvar]
    head = jnp.dot(h, whead, preferred_element_type=jnp.float32) + bhead
    mu = head[:, 0:LATENT_DIM]
    lv = head[:, LATENT_DIM:2 * LATENT_DIM]
    sigma = jnp.exp(lv)

    # reparameterized sample + KL term (self.kl in the reference).
    # log(sigma + 1e-8) is replaced by lv (= log(sigma)); identical except for
    # the negligible +1e-8, and more accurate (no exp->log round trip).
    z = mu + sigma * noise
    kl = sigma * sigma + mu * mu - lv - 0.5

    # Single 128-lane-dense store (unmasked vst), split back in the wrapper.
    out_ref[...] = jnp.concatenate([z, kl, mu, sigma], axis=-1)


def variational_encoder_forward(x, params, noise):
    """x: (B, ...) arbitrary trailing dims, flattened like torch.flatten(x, 1)."""
    B = x.shape[0]
    assert B % 8 == 0, "batch must be a multiple of 8 (f32 sublane tiling)"
    x_flat = jnp.reshape(x, (B, -1)).astype(jnp.float32)
    assert x_flat.shape[1] >= MIDI_WIDTH

    (wabs, babs, g1, be1, wenc, benc, g2, be2, wmu, bmu, wvar, bvar) = params

    # --- one-time layout plumbing (traced outside the kernel) ----------------
    # Fuse the two heads along the output dimension, then merge with the
    # encoder weight along the input dimension -> ONE (192, 64) operand.
    whead = jnp.concatenate([wmu, wvar], axis=1)                 # (64, 64)
    bhead = jnp.concatenate([bmu, bvar], axis=1)                 # (1, 64)
    wmid = jnp.concatenate([wenc, whead], axis=0)                # (192, 64)

    # Pack all small (1, N) parameter rows AND the noise into a single
    # (8 + B, 128) tile -> one DMA instead of eight (or nine) tiny padded DMAs.
    def pad_row(v):
        return jnp.pad(v, ((0, 0), (0, MIDI_OUT_WIDTH - v.shape[1])))

    param_rows = jnp.concatenate(
        [
            pad_row(babs), pad_row(g1), pad_row(be1),
            pad_row(benc), pad_row(g2), pad_row(be2),
            pad_row(bhead),
            jnp.zeros((1, MIDI_OUT_WIDTH), jnp.float32),
        ],
        axis=0,
    )                                                            # (8, 128)
    noise_rows = pad_row(noise.astype(jnp.float32))              # (B, 128)
    pack = jnp.concatenate([param_rows, noise_rows], axis=0)     # (8+B, 128)
    # --------------------------------------------------------------------------

    in_specs = [
        # Midi slice folded into the BlockSpec: only the first (B,128) block of
        # x_flat is DMA'd, no separate sliced copy is materialized.
        pl.BlockSpec((B, MIDI_WIDTH), lambda i: (0, 0)),
        pl.BlockSpec(wabs.shape, lambda i: (0, 0)),
        pl.BlockSpec(wmid.shape, lambda i: (0, 0)),
        pl.BlockSpec(pack.shape, lambda i: (0, 0)),
    ]
    out_specs = pl.BlockSpec((B, 4 * LATENT_DIM), lambda i: (0, 0))
    out_shape = jax.ShapeDtypeStruct((B, 4 * LATENT_DIM), jnp.float32)

    # Advisory cost hint so XLA schedules/overlaps around the custom call.
    flops = 2 * B * (MIDI_WIDTH * MIDI_OUT_WIDTH
                     + MIDI_OUT_WIDTH * HIDDEN_DIM
                     + HIDDEN_DIM * 2 * LATENT_DIM)
    bytes_accessed = 4 * (B * MIDI_WIDTH + wabs.size + wmid.size
                          + pack.size + B * 4 * LATENT_DIM)
    cost = pl.CostEstimate(
        flops=flops,
        transcendentals=B * (HIDDEN_DIM + LATENT_DIM),  # tanh + exp
        bytes_accessed=bytes_accessed,
    )

    slab = pl.pallas_call(
        encoder_kernel,
        out_shape=out_shape,
        grid=(1,),
        in_specs=in_specs,
        out_specs=out_specs,
        compiler_params=pltpu.CompilerParams(
            dimension_semantics=("arbitrary",)),
        cost_estimate=cost,
    )(x_flat, wabs, wmid, pack)

    z = slab[:, 0:LATENT_DIM]
    kl = slab[:, LATENT_DIM:2 * LATENT_DIM]
    return z, kl


def _reference_forward(x, params, noise):
    """Pure-JAX reference for correctness checking (mirrors the PyTorch module)."""
    B = x.shape[0]
    x_flat = jnp.reshape(x, (B, -1)).astype(jnp.float32)[:, :MIDI_WIDTH]
    (wabs, babs, g1, be1, wenc, benc, g2, be2, wmu, bmu, wvar, bvar) = params

    def bn(h, g, b):
        mean = jnp.mean(h, axis=0, keepdims=True)
        var = jnp.mean((h - mean) ** 2, axis=0, keepdims=True)
        return (h - mean) / jnp.sqrt(var + BN_EPS) * g + b

    h = x_flat @ wabs + babs
    h = bn(h, g1, be1)
    h = jnp.where(h > 0, h, LEAKY_SLOPE * h)
    h = h @ wenc + benc
    h = bn(h, g2, be2)
    h = jnp.tanh(h)
    mu = h @ wmu + bmu
    sigma = jnp.exp(h @ wvar + bvar)
    z = mu + sigma * noise
    kl = sigma ** 2 + mu ** 2 - jnp.log(sigma + 1e-8) - 0.5
    return z, kl


def _linear_init(key, fan_in, fan_out):
    # Mimic PyTorch nn.Linear default init: U(-1/sqrt(fan_in), 1/sqrt(fan_in)).
    kw, kb = jax.random.split(key)
    bound = 1.0 / jnp.sqrt(fan_in)
    w = jax.random.uniform(kw, (fan_in, fan_out), jnp.float32, -bound, bound)
    b = jax.random.uniform(kb, (1, fan_out), jnp.float32, -bound, bound)
    return w, b


def make_params(key):
    k = jax.random.split(key, 4)
    wabs, babs = _linear_init(k[0], MIDI_WIDTH, MIDI_OUT_WIDTH)
    wenc, benc = _linear_init(k[1], MIDI_OUT_WIDTH, HIDDEN_DIM)
    wmu, bmu = _linear_init(k[2], HIDDEN_DIM, LATENT_DIM)
    wvar, bvar = _linear_init(k[3], HIDDEN_DIM, LATENT_DIM)
    # BatchNorm1d defaults: weight=1, bias=0.
    g1 = jnp.ones((1, MIDI_OUT_WIDTH), jnp.float32)
    be1 = jnp.zeros((1, MIDI_OUT_WIDTH), jnp.float32)
    g2 = jnp.ones((1, HIDDEN_DIM), jnp.float32)
    be2 = jnp.zeros((1, HIDDEN_DIM), jnp.float32)
    return (wabs, babs, g1, be1, wenc, benc, g2, be2, wmu, bmu, wvar, bvar)


if __name__ == "__main__":
    key = jax.random.PRNGKey(0)
    k_x, k_p, k_n = jax.random.split(key, 3)

    B = 8
    # Input with >128 flattened features so the midi slice [:, :128] is a real slice.
    x = jax.random.normal(k_x, (B, 2, 75), jnp.float32)        # flatten -> (B, 150)
    params = make_params(k_p)
    # torch.distributions.Normal(0,1).sample(mu.shape) -> pre-sampled and fed in
    # to keep the kernel deterministic / bit-reproducible.
    noise = jax.random.normal(k_n, (B, LATENT_DIM), jnp.float32)

    z, kl = variational_encoder_forward(x, params, noise)
    jax.block_until_ready(z)
    jax.block_until_ready(kl)
    assert z.shape == (B, LATENT_DIM) and kl.shape == (B, LATENT_DIM)
    assert bool(jnp.all(jnp.isfinite(z))) and bool(jnp.all(jnp.isfinite(kl)))

    z_ref, kl_ref = _reference_forward(x, params, noise)
    assert bool(jnp.allclose(z, z_ref, rtol=1e-4, atol=1e-4))
    assert bool(jnp.allclose(kl, kl_ref, rtol=1e-4, atol=1e-4))
    print("KERNEL_OK")
</pallas_src>

<mosaic_0001>
module attributes {stable_mosaic.version = 11 : i64} {
  func.func @encoder_kernel(%arg0: i32, %arg1: memref<8x128xf32, #tpu.memory_space<vmem>>, %arg2: memref<128x128xf32, #tpu.memory_space<vmem>>, %arg3: memref<192x64xf32, #tpu.memory_space<vmem>>, %arg4: memref<16x128xf32, #tpu.memory_space<vmem>>, %arg5: memref<8x128xf32, #tpu.memory_space<vmem>>) attributes {dimension_semantics = [#tpu.dimension_semantics<arbitrary>], iteration_bounds = array<i64: 1>, scalar_prefetch = 0 : i64, scratch_operands = 0 : i64, tpu.core_type = #tpu.core_type<tc>, window_params = [{transform_indices = @transform_0, window_bounds = array<i64: 8, 128>}, {pipeline_mode = #tpu.pipeline_mode<synchronous>, transform_indices = @transform_1, window_bounds = array<i64: 128, 128>}, {pipeline_mode = #tpu.pipeline_mode<synchronous>, transform_indices = @transform_2, window_bounds = array<i64: 192, 64>}, {pipeline_mode = #tpu.pipeline_mode<synchronous>, transform_indices = @transform_3, window_bounds = array<i64: 16, 128>}, {pipeline_mode = #tpu.pipeline_mode<synchronous>, transform_indices = @transform_4, window_bounds = array<i64: 8, 128>}]} {
    %c0 = arith.constant 0 : index
    %c0_0 = arith.constant 0 : index
    %0 = vector.load %arg1[%c0, %c0_0] : memref<8x128xf32, #tpu.memory_space<vmem>>, vector<8x128xf32>
    %c0_1 = arith.constant 0 : index
    %c0_2 = arith.constant 0 : index
    %1 = vector.load %arg4[%c0_1, %c0_2] : memref<16x128xf32, #tpu.memory_space<vmem>>, vector<16x128xf32>
    %2 = vector.extract_strided_slice %1 {offsets = [0, 0], sizes = [1, 128], strides = [1, 1]} : vector<16x128xf32> to vector<1x128xf32>
    %3 = vector.extract_strided_slice %1 {offsets = [1, 0], sizes = [1, 128], strides = [1, 1]} : vector<16x128xf32> to vector<1x128xf32>
    %4 = vector.extract_strided_slice %1 {offsets = [2, 0], sizes = [1, 128], strides = [1, 1]} : vector<16x128xf32> to vector<1x128xf32>
    %5 = vector.extract_strided_slice %1 {offsets = [3, 0], sizes = [1, 64], strides = [1, 1]} : vector<16x128xf32> to vector<1x64xf32>
    %6 = vector.extract_strided_slice %1 {offsets = [4, 0], sizes = [1, 64], strides = [1, 1]} : vector<16x128xf32> to vector<1x64xf32>
    %7 = vector.extract_strided_slice %1 {offsets = [5, 0], sizes = [1, 64], strides = [1, 1]} : vector<16x128xf32> to vector<1x64xf32>
    %8 = vector.extract_strided_slice %1 {offsets = [6, 0], sizes = [1, 64], strides = [1, 1]} : vector<16x128xf32> to vector<1x64xf32>
    %9 = vector.extract_strided_slice %1 {offsets = [8, 0], sizes = [8, 32], strides = [1, 1]} : vector<16x128xf32> to vector<8x32xf32>
    %c0_3 = arith.constant 0 : index
    %c0_4 = arith.constant 0 : index
    %10 = vector.load %arg3[%c0_3, %c0_4] : memref<192x64xf32, #tpu.memory_space<vmem>>, vector<128x64xf32>
    %c128 = arith.constant 128 : index
    %c0_5 = arith.constant 0 : index
    %11 = vector.load %arg3[%c128, %c0_5] : memref<192x64xf32, #tpu.memory_space<vmem>>, vector<64x64xf32>
    %c0_6 = arith.constant 0 : index
    %c0_7 = arith.constant 0 : index
    %12 = vector.load %arg2[%c0_6, %c0_7] : memref<128x128xf32, #tpu.memory_space<vmem>>, vector<128x128xf32>
    %cst = arith.constant dense<0.000000e+00> : vector<8x128xf32>
    %13 = tpu.matmul %0, %12, %cst {dimension_numbers = #tpu.dot_dimension_numbers<[1], [0], [0], [1], [0, 0, 1, 1], [], []>} : vector<8x128xf32>, vector<128x128xf32>, vector<8x128xf32> -> vector<8x128xf32>
    %14 = vector.broadcast %2 : vector<1x128xf32> to vector<8x128xf32>
    %15 = arith.addf %13, %14 : vector<8x128xf32>
    %cst_8 = arith.constant dense<0.000000e+00> : vector<128xf32>
    %16 = vector.multi_reduction <add>, %15, %cst_8 [0] : vector<8x128xf32> to vector<128xf32>
    %17 = vector.shape_cast %16 : vector<128xf32> to vector<1x128xf32>
    %cst_9 = arith.constant 1.250000e-01 : f32
    %18 = vector.broadcast %cst_9 : f32 to vector<1x128xf32>
    %19 = arith.mulf %17, %18 : vector<1x128xf32>
    %20 = vector.broadcast %19 : vector<1x128xf32> to vector<8x128xf32>
    %21 = arith.subf %15, %20 : vector<8x128xf32>
    %22 = arith.mulf %21, %21 : vector<8x128xf32>
    %cst_10 = arith.constant dense<0.000000e+00> : vector<128xf32>
    %23 = vector.multi_reduction <add>, %22, %cst_10 [0] : vector<8x128xf32> to vector<128xf32>
    %24 = vector.shape_cast %23 : vector<128xf32> to vector<1x128xf32>
    %cst_11 = arith.constant 1.250000e-01 : f32
    %25 = vector.broadcast %cst_11 : f32 to vector<1x128xf32>
    %26 = arith.mulf %24, %25 : vector<1x128xf32>
    %cst_12 = arith.constant 9.99999974E-6 : f32
    %27 = vector.broadcast %cst_12 : f32 to vector<1x128xf32>
    %28 = arith.addf %26, %27 : vector<1x128xf32>
    %29 = math.rsqrt %28 : vector<1x128xf32>
    %30 = arith.mulf %3, %29 : vector<1x128xf32>
    %31 = vector.broadcast %30 : vector<1x128xf32> to vector<8x128xf32>
    %32 = arith.mulf %21, %31 : vector<8x128xf32>
    %33 = vector.broadcast %4 : vector<1x128xf32> to vector<8x128xf32>
    %34 = arith.addf %32, %33 : vector<8x128xf32>
    %cst_13 = arith.constant 0.000000e+00 : f32
    %35 = vector.broadcast %cst_13 : f32 to vector<8x128xf32>
    %36 = arith.cmpf ogt, %34, %35 : vector<8x128xf32>
    %cst_14 = arith.constant 0.00999999977 : f32
    %37 = vector.broadcast %cst_14 : f32 to vector<8x128xf32>
    %38 = arith.mulf %37, %34 : vector<8x128xf32>
    %39 = arith.select %36, %34, %38 : vector<8x128xi1>, vector<8x128xf32>
    %cst_15 = arith.constant dense<0.000000e+00> : vector<8x64xf32>
    %40 = tpu.matmul %39, %10, %cst_15 {dimension_numbers = #tpu.dot_dimension_numbers<[1], [0], [0], [1], [0, 0, 1, 1], [], []>} : vector<8x128xf32>, vector<128x64xf32>, vector<8x64xf32> -> vector<8x64xf32>
    %41 = vector.broadcast %5 : vector<1x64xf32> to vector<8x64xf32>
    %42 = arith.addf %40, %41 : vector<8x64xf32>
    %cst_16 = arith.constant dense<0.000000e+00> : vector<64xf32>
    %43 = vector.multi_reduction <add>, %42, %cst_16 [0] : vector<8x64xf32> to vector<64xf32>
    %44 = vector.shape_cast %43 : vector<64xf32> to vector<1x64xf32>
    %cst_17 = arith.constant 1.250000e-01 : f32
    %45 = vector.broadcast %cst_17 : f32 to vector<1x64xf32>
    %46 = arith.mulf %44, %45 : vector<1x64xf32>
    %47 = vector.broadcast %46 : vector<1x64xf32> to vector<8x64xf32>
    %48 = arith.subf %42, %47 : vector<8x64xf32>
    %49 = arith.mulf %48, %48 : vector<8x64xf32>
    %cst_18 = arith.constant dense<0.000000e+00> : vector<64xf32>
    %50 = vector.multi_reduction <add>, %49, %cst_18 [0] : vector<8x64xf32> to vector<64xf32>
    %51 = vector.shape_cast %50 : vector<64xf32> to vector<1x64xf32>
    %cst_19 = arith.constant 1.250000e-01 : f32
    %52 = vector.broadcast %cst_19 : f32 to vector<1x64xf32>
    %53 = arith.mulf %51, %52 : vector<1x64xf32>
    %cst_20 = arith.constant 9.99999974E-6 : f32
    %54 = vector.broadcast %cst_20 : f32 to vector<1x64xf32>
    %55 = arith.addf %53, %54 : vector<1x64xf32>
    %56 = math.rsqrt %55 : vector<1x64xf32>
    %57 = arith.mulf %6, %56 : vector<1x64xf32>
    %58 = vector.broadcast %57 : vector<1x64xf32> to vector<8x64xf32>
    %59 = arith.mulf %48, %58 : vector<8x64xf32>
    %60 = vector.broadcast %7 : vector<1x64xf32> to vector<8x64xf32>
    %61 = arith.addf %59, %60 : vector<8x64xf32>
    %62 = math.tanh %61 : vector<8x64xf32>
    %cst_21 = arith.constant dense<0.000000e+00> : vector<8x64xf32>
    %63 = tpu.matmul %62, %11, %cst_21 {dimension_numbers = #tpu.dot_dimension_numbers<[1], [0], [0], [1], [0, 0, 1, 1], [], []>} : vector<8x64xf32>, vector<64x64xf32>, vector<8x64xf32> -> vector<8x64xf32>
    %64 = vector.broadcast %8 : vector<1x64xf32> to vector<8x64xf32>
    %65 = arith.addf %63, %64 : vector<8x64xf32>
    %66 = vector.extract_strided_slice %65 {offsets = [0, 0], sizes = [8, 32], strides = [1, 1]} : vector<8x64xf32> to vector<8x32xf32>
    %67 = vector.extract_strided_slice %65 {offsets = [0, 32], sizes = [8, 32], strides = [1, 1]} : vector<8x64xf32> to vector<8x32xf32>
    %68 = math.exp %67 : vector<8x32xf32>
    %69 = arith.mulf %68, %9 : vector<8x32xf32>
    %70 = arith.addf %66, %69 : vector<8x32xf32>
    %71 = arith.mulf %68, %68 : vector<8x32xf32>
    %72 = arith.mulf %66, %66 : vector<8x32xf32>
    %73 = arith.addf %71, %72 : vector<8x32xf32>
    %74 = arith.subf %73, %67 : vector<8x32xf32>
    %cst_22 = arith.constant 5.000000e-01 : f32
    %75 = vector.broadcast %cst_22 : f32 to vector<8x32xf32>
    %76 = arith.subf %74, %75 : vector<8x32xf32>
    %77 = tpu.concatenate %70, %76, %66, %68 in 1 : vector<8x32xf32>, vector<8x32xf32>, vector<8x32xf32>, vector<8x32xf32> -> vector<8x128xf32>
    %c0_23 = arith.constant 0 : index
    %c0_24 = arith.constant 0 : index
    %78 = vector.load %arg5[%c0_23, %c0_24] : memref<8x128xf32, #tpu.memory_space<vmem>>, vector<8x128xf32>
    tpu.vector_store %arg5[%c0_23, %c0_24], %77 {strides = array<i32>} : memref<8x128xf32, #tpu.memory_space<vmem>>, vector<8x128xf32>,
    return
  }
  func.func @transform_0(%arg0: i32) -> (i32, i32) {
    %c0_i32 = arith.constant 0 : i32
    %c0_i32_0 = arith.constant 0 : i32
    %c0_i32_1 = arith.constant 0 : i32
    return %c0_i32, %c0_i32_0 : i32, i32
  }
  func.func @transform_1(%arg0: i32) -> (i32, i32) {
    %c0_i32 = arith.constant 0 : i32
    %c0_i32_0 = arith.constant 0 : i32
    %c0_i32_1 = arith.constant 0 : i32
    return %c0_i32, %c0_i32_0 : i32, i32
  }
  func.func @transform_2(%arg0: i32) -> (i32, i32) {
    %c0_i32 = arith.constant 0 : i32
    %c0_i32_0 = arith.constant 0 : i32
    %c0_i32_1 = arith.constant 0 : i32
    return %c0_i32, %c0_i32_0 : i32, i32
  }
  func.func @transform_3(%arg0: i32) -> (i32, i32) {
    %c0_i32 = arith.constant 0 : i32
    %c0_i32_0 = arith.constant 0 : i32
    %c0_i32_1 = arith.constant 0 : i32
    return %c0_i32, %c0_i32_0 : i32, i32
  }
  func.func @transform_4(%arg0: i32) -> (i32, i32) {
    %c0_i32 = arith.constant 0 : i32
    %c0_i32_0 = arith.constant 0 : i32
    %c0_i32_1 = arith.constant 0 : i32
    return %c0_i32, %c0_i32_0 : i32, i32
  }
}

</mosaic_0001>

<llo_original>
// kernel: tpu_custom_call.1
$region0: #{tpu_custom_call.1}
  #allocation0 [shape = 'u32[]', space=smem, size = 0x4, offset = 0x4, fixed_abs, tag = 'smem constant byte address 0x4 - core index']
  #allocation1 [shape = 'u32[144,128]{1,0:T(1,128)}', space=vmem, size = 0x12000, scoped, tag = 'internal scratch']
  %s0 = inlined_call_operand.vmem [shape: f32[8,150], index: 0, kind: input, shape index: {}]
  %s1 = inlined_call_operand.vmem [shape: f32[128,128], index: 1, kind: input, shape index: {}]
  %s2 = inlined_call_operand.vmem [shape: f32[192,64], index: 2, kind: input, shape index: {}]
  %s3 = inlined_call_operand.vmem [shape: f32[16,128], index: 3, kind: input, shape index: {}]
  %s4 = inlined_call_operand.hbm [shape: f32[8,128], index: 4, kind: output, shape index: {}]
  %s5 = sld [smem:[#allocation0]]
  $region26: #{tpu_custom_call.1} parent=0
    _
  %s7 = ssub.s32 1, %s5
  %s8 = scalar_select 0, %s7, %s5
  $region1: #{tpu_custom_call.1} parent=0
    #allocation2 [shape = 'u8[4096]{0}', space=vmem, size = 0x1000, scoped, tag = 'output window, operand 0, single buffered']
    #allocation3 [shape = 's32[1]{0}', space=sflag, size = 0x4, scoped, tag = 'scoped memory for tpu_custom_call.1']
    %9 = vsyncpa [#allocation3], 0
    // Predicated region
    $region2: #{tpu_custom_call.1} parent=1 // pred_check
      _
    $region3: #{tpu_custom_call.1} parent=1 // pred_check_branch
      %11 = sbr.rel (0) target = $region5
    $region4: #{tpu_custom_call.1} parent=1 // pred_region
      _
    $region5: #{tpu_custom_call.1} parent=1 // pred_fallthru
      _
    // Predicated region
    $region6: #{tpu_custom_call.1} parent=1 // pred_check
      _
    $region7: #{tpu_custom_call.1} parent=1 // pred_check_branch
      %13 = sbr.rel (0) target = $region9
    $region8: #{tpu_custom_call.1} parent=1 // pred_region
      _
    $region9: #{tpu_custom_call.1} parent=1 // pred_fallthru
      _
    // Predicated region
    $region10: #{tpu_custom_call.1} parent=1 // pred_check
      _
    $region11: #{tpu_custom_call.1} parent=1 // pred_check_branch
      %15 = sbr.rel (0) target = $region13
    $region12: #{tpu_custom_call.1} parent=1 // pred_region
      _
    $region13: #{tpu_custom_call.1} parent=1 // pred_fallthru
      _
    // Predicated region
    $region14: #{tpu_custom_call.1} parent=1 // pred_check
      _
    $region15: #{tpu_custom_call.1} parent=1 // pred_check_branch
      %17 = sbr.rel (0) target = $region17
    $region16: #{tpu_custom_call.1} parent=1 // pred_region
      _
    $region17: #{tpu_custom_call.1} parent=1 // pred_fallthru
      _
    %v18 = vld [vmem:[%s0] sm:$0xff]
    %v19 = vld [vmem:[%s3] sm:$0xff]
    %v20 = vld [vmem:[%s3 + $0x8] sm:$0xff]
    %v21 = vld [vmem:[%s2] sm:$0xff]
    %v22 = vld [vmem:[%s2 + $0x8] sm:$0xff]
    %v23 = vld [vmem:[%s2 + $0x10] sm:$0xff]
    %v24 = vld [vmem:[%s2 + $0x18] sm:$0xff]
    %v25 = vld [vmem:[%s2 + $0x20] sm:$0xff]
    %v26 = vld [vmem:[%s2 + $0x28] sm:$0xff]
    %v27 = vld [vmem:[%s2 + $0x30] sm:$0xff]
    %v28 = vld [vmem:[%s2 + $0x38] sm:$0xff]
    %v29 = vld [vmem:[%s2 + $0x40] sm:$0xff]
    %v30 = vld [vmem:[%s2 + $0x48] sm:$0xff]
    %v31 = vld [vmem:[%s2 + $0x50] sm:$0xff]
    %v32 = vld [vmem:[%s2 + $0x58] sm:$0xff]
    %v33 = vld [vmem:[%s2 + $0x60] sm:$0xff]
    %v34 = vld [vmem:[%s2 + $0x68] sm:$0xff]
    %v35 = vld [vmem:[%s2 + $0x70] sm:$0xff]
    %v36 = vld [vmem:[%s2 + $0x78] sm:$0xff]
    %v37 = vld [vmem:[%s2 + $0x80] sm:$0xff]
    %v38 = vld [vmem:[%s2 + $0x88] sm:$0xff]
    %v39 = vld [vmem:[%s2 + $0x90] sm:$0xff]
    %v40 = vld [vmem:[%s2 + $0x98] sm:$0xff]
    %v41 = vld [vmem:[%s2 + $0xa0] sm:$0xff]
    %v42 = vld [vmem:[%s2 + $0xa8] sm:$0xff]
    %v43 = vld [vmem:[%s2 + $0xb0] sm:$0xff]
    %v44 = vld [vmem:[%s2 + $0xb8] sm:$0xff]
    %v45 = vld [vmem:[%s1] sm:$0xff]
    %v46 = vld [vmem:[%s1 + $0x8] sm:$0xff]
    %v47 = vld [vmem:[%s1 + $0x10] sm:$0xff]
    %v48 = vld [vmem:[%s1 + $0x18] sm:$0xff]
    %v49 = vld [vmem:[%s1 + $0x20] sm:$0xff]
    %v50 = vld [vmem:[%s1 + $0x28] sm:$0xff]
    %v51 = vld [vmem:[%s1 + $0x30] sm:$0xff]
    %v52 = vld [vmem:[%s1 + $0x38] sm:$0xff]
    %v53 = vld [vmem:[%s1 + $0x40] sm:$0xff]
    %v54 = vld [vmem:[%s1 + $0x48] sm:$0xff]
    %v55 = vld [vmem:[%s1 + $0x50] sm:$0xff]
    %v56 = vld [vmem:[%s1 + $0x58] sm:$0xff]
    %v57 = vld [vmem:[%s1 + $0x60] sm:$0xff]
    %v58 = vld [vmem:[%s1 + $0x68] sm:$0xff]
    %v59 = vld [vmem:[%s1 + $0x70] sm:$0xff]
    %v60 = vld [vmem:[%s1 + $0x78] sm:$0xff]
    %v61 = vlaneseq
    %v62 = vshrl.u32 %v61, 7
    %v63 = vsub.s32 0, %v62
    %v64 = vrot.slane %v19, %v63
    %65 = vmatprep.subr.mxu0 0.0
    %66 = vmatpush1.msra.mxu0 %v45
    %67 = vmatprep.subr.mxu0 0.0
    %68 = vmatpush1.msra.mxu0 %v46
    %69 = vmatprep.subr.mxu0 0.0
    %70 = vmatpush1.msra.mxu0 %v47
    %71 = vmatprep.subr.mxu0 0.0
    %72 = vmatpush1.msra.mxu0 %v48
    %73 = vmatprep.subr.mxu0 0.0
    %74 = vmatpush1.msra.mxu0 %v49
    %75 = vmatprep.subr.mxu0 0.0
    %76 = vmatpush1.msra.mxu0 %v50
    %77 = vmatprep.subr.mxu0 0.0
    %78 = vmatpush1.msra.mxu0 %v51
    %79 = vmatprep.subr.mxu0 0.0
    %80 = vmatpush1.msra.mxu0 %v52
    %81 = vmatprep.subr.mxu0 0.0
    %82 = vmatpush1.msra.mxu0 %v53
    %83 = vmatprep.subr.mxu0 0.0
    %84 = vmatpush1.msra.mxu0 %v54
    %85 = vmatprep.subr.mxu0 0.0
    %86 = vmatpush1.msra.mxu0 %v55
    %87 = vmatprep.subr.mxu0 0.0
    %88 = vmatpush1.msra.mxu0 %v56
    %89 = vmatprep.subr.mxu0 0.0
    %90 = vmatpush1.msra.mxu0 %v57
    %91 = vmatprep.subr.mxu0 0.0
    %92 = vmatpush1.msra.mxu0 %v58
    %93 = vmatprep.subr.mxu0 0.0
    %94 = vmatpush1.msra.mxu0 %v59
    %95 = vmatprep.subr.mxu0 0.0
    %96 = vmatpush1.msra.mxu0 %v60
    %97 = vmatprep.subr.mxu0 0.0
    %98 = vmatpush1.msra.mxu0 0.0
    %99 = vmatprep.subr.mxu0 0.0
    %100 = vmatpush1.msra.mxu0 0.0
    %101 = vmatprep.subr.mxu0 0.0
    %102 = vmatpush1.msra.mxu0 0.0
    %103 = vmatprep.subr.mxu0 0.0
    %104 = vmatpush1.msra.mxu0 0.0
    %105 = vmatprep.subr.mxu0 0.0
    %106 = vmatpush1.msra.mxu0 0.0
    %107 = vmatprep.subr.mxu0 0.0
    %108 = vmatpush1.msra.mxu0 0.0
    %109 = vmatprep.subr.mxu0 0.0
    %110 = vmatpush1.msra.mxu0 0.0
    %111 = vmatprep.subr.mxu0 0.0
    %112 = vmatpush1.msra.mxu0 0.0
    %113 = vmatprep.subr.mxu0 0.0
    %114 = vmatpush1.msra.mxu0 0.0
    %115 = vmatprep.subr.mxu0 0.0
    %116 = vmatpush1.msra.mxu0 0.0
    %117 = vmatprep.subr.mxu0 0.0
    %118 = vmatpush1.msra.mxu0 0.0
    %119 = vmatprep.subr.mxu0 0.0
    %120 = vmatpush1.msra.mxu0 0.0
    %121 = vmatprep.subr.mxu0 0.0
    %122 = vmatpush1.msra.mxu0 0.0
    %123 = vmatprep.subr.mxu0 0.0
    %124 = vmatpush1.msra.mxu0 0.0
    %125 = vmatprep.subr.mxu0 0.0
    %126 = vmatpush1.msra.mxu0 0.0
    %127 = vmatprep.subr.mxu0 0.0
    %128 = vmatpush1.msra.mxu0 0.0
    %129 = vmatprep.mubr.f32.mxu0 0.0
    %130 = vmatmul.mubr.f32.gmra.mrb[0].mxu0 %v18
    %v131 = vpop.f32.mrb[0].mxu0
    %v132 = vadd.f32 %v64, %v131
    %v133 = vpop.f32.mrb[0].mxu0
    %134 = vdwg.mxu0
    %v135 = vrot.slane %v132, 4
    %v136 = vadd.f32 %v132, %v135
    %v137 = vrot.slane %v136, 2
    %v138 = vadd.f32 %v136, %v137
    %v139 = vrot.slane %v138, 1
    %v140 = vadd.f32 %v138, %v139
    %v141 = vmul.f32 %v140, 0.125
    %v142 = vsub.f32 %v132, %v141
    %v143 = vmul.f32 %v142, %v142
    %v144 = vrot.slane %v143, 4
    %v145 = vadd.f32 %v143, %v144
    %v146 = vrot.slane %v145, 2
    %v147 = vadd.f32 %v145, %v146
    %v148 = vrot.slane %v147, 1
    %v149 = vadd.f32 %v147, %v148
    %v150 = vmul.f32 %v149, 0.125
    %v151 = vadd.f32 %v150, 1e-05
    %v152 = vrsqrt.pop %v151
    %v153 = vmul.f32 %v19, %v152
    %v154 = vlaneseq
    %v155 = vshrl.u32 %v154, 7
    %v156 = vsub.s32 1, %v155
    %v157 = vrot.slane %v153, %v156
    %v158 = vmul.f32 %v142, %v157
    %v159 = vlaneseq
    %v160 = vshrl.u32 %v159, 7
    %v161 = vsub.s32 2, %v160
    %v162 = vrot.slane %v19, %v161
    %v163 = vadd.f32 %v158, %v162
    %vm164 = vcmp.gt.f32.partialorder %v163, 0.0
    %v165 = vmul.f32 %v163, 0.01
    %v166 = vsel %vm164, %v163, %v165
    %v167 = vlaneseq
    %v168 = vshrl.u32 %v167, 7
    %v169 = vsub.s32 3, %v168
    %v170 = vrot.slane %v19, %v169
    %171 = vmatprep.subr.mxu0 0.0
    %172 = vmatpush1.msra.mxu0 %v21
    %173 = vmatprep.subr.mxu0 0.0
    %174 = vmatpush1.msra.mxu0 %v22
    %175 = vmatprep.subr.mxu0 0.0
    %176 = vmatpush1.msra.mxu0 %v23
    %177 = vmatprep.subr.mxu0 0.0
    %178 = vmatpush1.msra.mxu0 %v24
    %179 = vmatprep.subr.mxu0 0.0
    %180 = vmatpush1.msra.mxu0 %v25
    %181 = vmatprep.subr.mxu0 0.0
    %182 = vmatpush1.msra.mxu0 %v26
    %183 = vmatprep.subr.mxu0 0.0
    %184 = vmatpush1.msra.mxu0 %v27
    %185 = vmatprep.subr.mxu0 0.0
    %186 = vmatpush1.msra.mxu0 %v28
    %187 = vmatprep.subr.mxu0 0.0
    %188 = vmatpush1.msra.mxu0 %v29
    %189 = vmatprep.subr.mxu0 0.0
    %190 = vmatpush1.msra.mxu0 %v30
    %191 = vmatprep.subr.mxu0 0.0
    %192 = vmatpush1.msra.mxu0 %v31
    %193 = vmatprep.subr.mxu0 0.0
    %194 = vmatpush1.msra.mxu0 %v32
    %195 = vmatprep.subr.mxu0 0.0
    %196 = vmatpush1.msra.mxu0 %v33
    %197 = vmatprep.subr.mxu0 0.0
    %198 = vmatpush1.msra.mxu0 %v34
    %199 = vmatprep.subr.mxu0 0.0
    %200 = vmatpush1.msra.mxu0 %v35
    %201 = vmatprep.subr.mxu0 0.0
    %202 = vmatpush1.msra.mxu0 %v36
    %203 = vmatprep.subr.mxu0 0.0
    %204 = vmatpush1.msra.mxu0 0.0
    %205 = vmatprep.subr.mxu0 0.0
    %206 = vmatpush1.msra.mxu0 0.0
    %207 = vmatprep.subr.mxu0 0.0
    %208 = vmatpush1.msra.mxu0 0.0
    %209 = vmatprep.subr.mxu0 0.0
    %210 = vmatpush1.msra.mxu0 0.0
    %211 = vmatprep.subr.mxu0 0.0
    %212 = vmatpush1.msra.mxu0 0.0
    %213 = vmatprep.subr.mxu0 0.0
    %214 = vmatpush1.msra.mxu0 0.0
    %215 = vmatprep.subr.mxu0 0.0
    %216 = vmatpush1.msra.mxu0 0.0
    %217 = vmatprep.subr.mxu0 0.0
    %218 = vmatpush1.msra.mxu0 0.0
    %219 = vmatprep.subr.mxu0 0.0
    %220 = vmatpush1.msra.mxu0 0.0
    %221 = vmatprep.subr.mxu0 0.0
    %222 = vmatpush1.msra.mxu0 0.0
    %223 = vmatprep.subr.mxu0 0.0
    %224 = vmatpush1.msra.mxu0 0.0
    %225 = vmatprep.subr.mxu0 0.0
    %226 = vmatpush1.msra.mxu0 0.0
    %227 = vmatprep.subr.mxu0 0.0
    %228 = vmatpush1.msra.mxu0 0.0
    %229 = vmatprep.subr.mxu0 0.0
    %230 = vmatpush1.msra.mxu0 0.0
    %231 = vmatprep.subr.mxu0 0.0
    %232 = vmatpush1.msra.mxu0 0.0
    %233 = vmatprep.subr.mxu0 0.0
    %234 = vmatpush1.msra.mxu0 0.0
    %235 = vmatprep.mubr.f32.mxu0 0.0
    %236 = vmatmul.mubr.f32.gmra.mrb[0].mxu0 %v166
    %v237 = vpop.f32.mrb[0].mxu0
    %v238 = vadd.f32 %v170, %v237
    %v239 = vpop.f32.mrb[0].mxu0
    %240 = vdwg.mxu0
    %vm241 = vcmask 523264
    %v242 = vsel %vm241, %v238, 0.0
    %v243 = vrot.slane %v242, 4
    %v244 = vadd.f32 %v242, %v243
    %v245 = vrot.slane %v244, 2
    %v246 = vadd.f32 %v244, %v245
    %v247 = vrot.slane %v246, 1
    %v248 = vadd.f32 %v246, %v247
    %v249 = vmul.f32 %v248, 0.125
    %v250 = vsub.f32 %v238, %v249
    %v251 = vmul.f32 %v250, %v250
    %v252 = vsel %vm241, %v251, 0.0
    %v253 = vrot.slane %v252, 4
    %v254 = vadd.f32 %v252, %v253
    %v255 = vrot.slane %v254, 2
    %v256 = vadd.f32 %v254, %v255
    %v257 = vrot.slane %v256, 1
    %v258 = vadd.f32 %v256, %v257
    %v259 = vmul.f32 %v258, 0.125
    %v260 = vadd.f32 %v259, 1e-05
    %v261 = vrsqrt.pop %v260
    %v262 = vmul.f32 %v19, %v261
    %v263 = vlaneseq
    %v264 = vshrl.u32 %v263, 7
    %v265 = vsub.s32 4, %v264
    %v266 = vrot.slane %v262, %v265
    %v267 = vmul.f32 %v250, %v266
    %v268 = vlaneseq
    %v269 = vshrl.u32 %v268, 7
    %v270 = vsub.s32 5, %v269
    %v271 = vrot.slane %v19, %v270
    %v272 = vadd.f32 %v267, %v271
    %v273 = vtanh.pop %v272
    %v274 = vlaneseq
    %v275 = vshrl.u32 %v274, 7
    %v276 = vsub.s32 6, %v275
    %v277 = vrot.slane %v19, %v276
    %v279 = vsel %vm241, %v273, 0
    %281 = vmatprep.subr.mxu0 0.0
    %282 = vmatpush1.msra.mxu0 %v37
    %283 = vmatprep.subr.mxu0 0.0
    %284 = vmatpush1.msra.mxu0 %v38
    %285 = vmatprep.subr.mxu0 0.0
    %286 = vmatpush1.msra.mxu0 %v39
    %287 = vmatprep.subr.mxu0 0.0
    %288 = vmatpush1.msra.mxu0 %v40
    %289 = vmatprep.subr.mxu0 0.0
    %290 = vmatpush1.msra.mxu0 %v41
    %291 = vmatprep.subr.mxu0 0.0
    %292 = vmatpush1.msra.mxu0 %v42
    %293 = vmatprep.subr.mxu0 0.0
    %294 = vmatpush1.msra.mxu0 %v43
    %295 = vmatprep.subr.mxu0 0.0
    %296 = vmatpush1.msra.mxu0 %v44
    %297 = vmatprep.subr.mxu0 0.0
    %298 = vmatpush1.msra.mxu0 0.0
    %299 = vmatprep.subr.mxu0 0.0
    %300 = vmatpush1.msra.mxu0 0.0
    %301 = vmatprep.subr.mxu0 0.0
    %302 = vmatpush1.msra.mxu0 0.0
    %303 = vmatprep.subr.mxu0 0.0
    %304 = vmatpush1.msra.mxu0 0.0
    %305 = vmatprep.subr.mxu0 0.0
    %306 = vmatpush1.msra.mxu0 0.0
    %307 = vmatprep.subr.mxu0 0.0
    %308 = vmatpush1.msra.mxu0 0.0
    %309 = vmatprep.subr.mxu0 0.0
    %310 = vmatpush1.msra.mxu0 0.0
    %311 = vmatprep.subr.mxu0 0.0
    %312 = vmatpush1.msra.mxu0 0.0
    %313 = vmatprep.subr.mxu0 0.0
    %314 = vmatpush1.msra.mxu0 0.0
    %315 = vmatprep.subr.mxu0 0.0
    %316 = vmatpush1.msra.mxu0 0.0
    %317 = vmatprep.subr.mxu0 0.0
    %318 = vmatpush1.msra.mxu0 0.0
    %319 = vmatprep.subr.mxu0 0.0
    %320 = vmatpush1.msra.mxu0 0.0
    %321 = vmatprep.subr.mxu0 0.0
    %322 = vmatpush1.msra.mxu0 0.0
    %323 = vmatprep.subr.mxu0 0.0
    %324 = vmatpush1.msra.mxu0 0.0
    %325 = vmatprep.subr.mxu0 0.0
    %326 = vmatpush1.msra.mxu0 0.0
    %327 = vmatprep.subr.mxu0 0.0
    %328 = vmatpush1.msra.mxu0 0.0
    %329 = vmatprep.subr.mxu0 0.0
    %330 = vmatpush1.msra.mxu0 0.0
    %331 = vmatprep.subr.mxu0 0.0
    %332 = vmatpush1.msra.mxu0 0.0
    %333 = vmatprep.subr.mxu0 0.0
    %334 = vmatpush1.msra.mxu0 0.0
    %335 = vmatprep.subr.mxu0 0.0
    %336 = vmatpush1.msra.mxu0 0.0
    %337 = vmatprep.subr.mxu0 0.0
    %338 = vmatpush1.msra.mxu0 0.0
    %339 = vmatprep.subr.mxu0 0.0
    %340 = vmatpush1.msra.mxu0 0.0
    %341 = vmatprep.subr.mxu0 0.0
    %342 = vmatpush1.msra.mxu0 0.0
    %343 = vmatprep.subr.mxu0 0.0
    %344 = vmatpush1.msra.mxu0 0.0
    %345 = vmatprep.mubr.f32.mxu0 0.0
    %346 = vmatmul.mubr.f32.gmra.mrb[0].mxu0 %v279
    %v347 = vpop.f32.mrb[0].mxu0
    %v348 = vadd.f32 %v277, %v347
    %v349 = vpop.f32.mrb[0].mxu0
    %350 = vdwg.mxu0
    %v351 = vmul.f32 %v348, 1.442695
    %v352 = vpow.pop %v351
    %354 = vrot.lane.b32.xlu0 %v20, 32
    %v355 = vpop.permute.xlu0 %354
    %v357 = vmul.f32 %v352, %v355
    %359 = vrot.lane.b32.xlu0 %v357, 96
    %v360 = vpop.permute.xlu0 %359
    %v362 = vadd.f32 %v348, %v360
    %v363 = vmul.f32 %v352, %v352
    %v364 = vmul.f32 %v348, %v348
    %366 = vrot.lane.b32.xlu0 %v364, 32
    %v367 = vpop.permute.xlu0 %366
    %v369 = vadd.f32 %v363, %v367
    %v370 = vsub.f32 %v369, %v348
    %v371 = vsub.f32 %v370, 0.5
    %373 = vrot.lane.b32.xlu0 %v348, 64
    %v374 = vpop.permute.xlu0 %373
    %377 = vrot.lane.b32.xlu0 %v352, 64
    %v378 = vpop.permute.xlu0 %377
    %vm380 = vcmask 261120
    %v381 = vsel %vm380, %v362, %v371
    %v382 = vsel %vm241, %v381, %v374
    %vm383 = vcmask 785408
    %v384 = vsel %vm383, %v382, %v378
    %385 = vst [vmem:[#allocation2] sm:$0xff] %v384
    // Predicated region
    $region18: #{tpu_custom_call.1} parent=1 // pred_check
      _
    $region19: #{tpu_custom_call.1} parent=1 // pred_check_branch
      %387 = sbr.rel (0) target = $region21
    $region20: #{tpu_custom_call.1} parent=1 // pred_region
      %s389 = ssub.s32 128, 128
      %390 = vsyncadd [#allocation3], %s389
      %s392 = sshll.u32 [#allocation2], 4
      %s393 = int_to_ptr.vmem [resolvable:$true] %s392
      %395 = dma.vmem_to_hbm [thread:$0]  %s393, 128, %s4, [#allocation3]
    $region21: #{tpu_custom_call.1} parent=1 // pred_fallthru
      _
    // Predicated region
    $region22: #{tpu_custom_call.1} parent=1 // pred_check
      _
    $region23: #{tpu_custom_call.1} parent=1 // pred_check_branch
      %397 = sbr.rel (0) target = $region25
    $region24: #{tpu_custom_call.1} parent=1 // pred_region
      %398 = dma.done [#allocation3], 128
    $region25: #{tpu_custom_call.1} parent=1 // pred_fallthru
      _
    %399 = vsyncpa [#allocation3], 1

</llo_original>
